<compile_context>
chip_gen: v5e
topology: v5e:2x2
jax: 0.10.0
libtpu: 0.0.40
codegen_flags: <defaults>
</compile_context>

<pallas_src>
import functools

import jax
import jax.numpy as jnp
from jax import lax
from jax.experimental import pallas as pl
from jax.experimental.pallas import tpu as pltpu


def _grn_kernel(x_ref, gamma_ref, beta_ref, o_ref, *, inv_c, hw_chunk):
    bn, hw, c = x_ref.shape
    nchunks = hw // hw_chunk

    # ---- square-sum over spatial (HW), accumulated in f32 -------------------
    if nchunks == 1:
        xf = x_ref[...].astype(jnp.float32)
        ssq = jnp.sum(xf * xf, axis=1, keepdims=True)              # (bn, 1, c)
    else:
        def body(i, acc):
            start = pl.multiple_of(i * hw_chunk, hw_chunk)
            xc = x_ref[:, pl.ds(start, hw_chunk), :].astype(jnp.float32)
            return acc + jnp.sum(xc * xc, axis=1, keepdims=True)
        # nchunks is static and small -> unroll so the LLO scheduler can
        # interleave loads/casts/MACs of adjacent chunks.
        ssq = lax.fori_loop(0, nchunks, body,
                            jnp.zeros((bn, 1, c), jnp.float32),
                            unroll=True)

    gx = jnp.sqrt(ssq)                                             # (bn, 1, c)
    denom = jnp.sum(gx, axis=-1, keepdims=True) * inv_c + 1e-6     # (bn, 1, 1)
    nx = gx * pl.reciprocal(denom, approx=False)                   # (bn, 1, c)

    # folded affine: gamma*(x*nx) + beta + x  ==  x*(gamma*nx + 1) + beta
    # (scale/shift cast to the IO dtype keeps the apply a single native-dtype
    #  FMA per element; exact for f32, within bf16 noise for bf16 inputs.)
    scale = (gamma_ref[...] * nx + 1.0).astype(o_ref.dtype)        # (bn, 1, c)
    shift = beta_ref[...].astype(o_ref.dtype)                      # (1, 1, c)
    o_ref[...] = x_ref[...] * scale + shift


def _vmem_capacity_bytes():
    """Physical VMEM per TensorCore; conservative (v7x-sized) fallback."""
    try:
        info = pltpu.get_tpu_info()
        cap = getattr(info, "vmem_capacity_bytes", None)
        if cap:
            return int(cap)
    except Exception:
        pass
    return 64 * 1024 * 1024


def _pick_bn(n, per_elem_block_bytes, c, target_bytes):
    """Largest divisor of n giving ~target-sized blocks.

    Preference order on the resulting grid-step count: >=4 even steps (v7x:
    two TensorCores each with >=2 steps to pipeline), then >=2 even, then >=2,
    then anything.  Bn is also capped so the (bn,1,C) f32 stats temporaries
    (ssq/gx/nx/scale, ~4 live) stay well inside the 256 KiB vreg file.
    """
    stats_cap = max(1, 4096 // max(c, 1))        # bn * C <= 4096
    divisors = [d for d in range(1, n + 1) if n % d == 0]

    def feasible(bn):
        return bn <= stats_cap and bn * per_elem_block_bytes <= target_bytes

    for min_steps, need_even in ((4, True), (2, True), (2, False), (1, False)):
        cands = [bn for bn in divisors
                 if feasible(bn)
                 and (n // bn) >= min_steps
                 and (not need_even or (n // bn) % 2 == 0)]
        if cands:
            return max(cands)
    return 1


def _pick_hw_chunk(hw, row_f32_bytes, target_bytes):
    """Largest divisor of hw whose f32 square-sum slab stays under ~target,
    preferring sublane-aligned (multiple-of-8) chunk lengths."""
    if hw * row_f32_bytes <= target_bytes:
        return hw
    best_any, best_aligned = 1, None
    for d in range(1, hw + 1):
        if hw % d or d * row_f32_bytes > target_bytes:
            continue
        best_any = d
        if d % 8 == 0:
            best_aligned = d
    return best_aligned if best_aligned is not None else best_any


def grn_pallas(x, gamma, beta):
    """x: (N, H, W, C); gamma, beta: (1, 1, 1, C)."""
    N, H, W, C = x.shape
    HW = H * W
    x2 = x.reshape(N, HW, C)                      # free (row-major) reshape
    g2 = gamma.reshape(1, 1, C).astype(jnp.float32)
    b2 = beta.reshape(1, 1, C).astype(jnp.float32)

    itemsize = jnp.dtype(x.dtype).itemsize
    per_elem_bytes = HW * C * itemsize            # one batch element's block

    vmem_cap = _vmem_capacity_bytes()
    vmem_ceiling = int(vmem_cap * 0.80)           # ~51 MiB v7x, ~102 MiB v5e/v6e
    block_target = min(8 * 1024 * 1024, vmem_ceiling // 8)
    slab_target = min(4 * 1024 * 1024, vmem_ceiling // 16)

    Bn = _pick_bn(N, per_elem_bytes, C, block_target)
    hw_chunk = _pick_hw_chunk(HW, Bn * C * 4, slab_target)

    block_bytes = Bn * per_elem_bytes
    # double-buffered in + out blocks, f32 square-sum slab (x2), stats, headroom
    vmem_est = (4 * block_bytes
                + 2 * Bn * hw_chunk * C * 4
                + 4 * Bn * C * 4
                + (2 << 20))
    vmem_limit = int(min(max(vmem_est, 32 * 1024 * 1024), vmem_ceiling))

    kernel = functools.partial(_grn_kernel, inv_c=1.0 / C, hw_chunk=hw_chunk)

    out = pl.pallas_call(
        kernel,
        out_shape=jax.ShapeDtypeStruct((N, HW, C), x.dtype),
        grid_spec=pltpu.PrefetchScalarGridSpec(
            num_scalar_prefetch=0,
            grid=(N // Bn,),
            in_specs=[
                pl.BlockSpec((Bn, HW, C), lambda n: (n, 0, 0)),
                pl.BlockSpec((1, 1, C), lambda n: (0, 0, 0)),
                pl.BlockSpec((1, 1, C), lambda n: (0, 0, 0)),
            ],
            out_specs=pl.BlockSpec((Bn, HW, C), lambda n: (n, 0, 0)),
        ),
        compiler_params=pltpu.CompilerParams(
            dimension_semantics=("parallel",),
            vmem_limit_bytes=vmem_limit,
        ),
    )(x2, g2, b2)

    return out.reshape(N, H, W, C)


def grn_ref(x, gamma, beta):
    gx = jnp.sqrt(jnp.sum(x.astype(jnp.float32) ** 2, axis=(1, 2), keepdims=True))
    nx = gx / (jnp.mean(gx, axis=-1, keepdims=True) + 1e-6)
    return gamma * (x * nx) + beta + x


if __name__ == "__main__":
    key = jax.random.PRNGKey(0)
    kx, kg, kb = jax.random.split(key, 3)

    # Module __init__ uses zeros for gamma/beta; use deterministic random
    # values so the scale/shift path is actually exercised.
    N, H, W, C = 2, 8, 8, 32  # dim = C = 32
    x = jax.random.normal(kx, (N, H, W, C), dtype=jnp.float32)
    gamma = 0.1 * jax.random.normal(kg, (1, 1, 1, C), dtype=jnp.float32)
    beta = 0.1 * jax.random.normal(kb, (1, 1, 1, C), dtype=jnp.float32)

    out = jax.block_until_ready(grn_pallas(x, gamma, beta))
    ref = grn_ref(x, gamma, beta)
    assert out.shape == (N, H, W, C)
    assert jnp.allclose(out, ref, atol=1e-5, rtol=1e-5), "mismatch vs reference"

    # Second small shape: odd batch, HW not a multiple of 8 (ConvNeXt stage-4
    # style 7x7 spatial) to exercise the non-sublane-aligned layout.
    N2, H2, W2, C2 = 3, 7, 7, 48
    x2 = jax.random.normal(kx, (N2, H2, W2, C2), dtype=jnp.float32)
    gamma2 = 0.1 * jax.random.normal(kg, (1, 1, 1, C2), dtype=jnp.float32)
    beta2 = 0.1 * jax.random.normal(kb, (1, 1, 1, C2), dtype=jnp.float32)
    out2 = jax.block_until_ready(grn_pallas(x2, gamma2, beta2))
    ref2 = grn_ref(x2, gamma2, beta2)
    assert out2.shape == (N2, H2, W2, C2)
    assert jnp.allclose(out2, ref2, atol=1e-5, rtol=1e-5), "mismatch vs reference (7x7)"

    print("KERNEL_OK")
</pallas_src>

<mosaic_0001>
module attributes {stable_mosaic.version = 11 : i64} {
  func.func @_grn_kernel(%arg0: i32, %arg1: memref<1x64x32xf32, #tpu.memory_space<vmem>>, %arg2: memref<1x1x32xf32, #tpu.memory_space<vmem>>, %arg3: memref<1x1x32xf32, #tpu.memory_space<vmem>>, %arg4: memref<1x64x32xf32, #tpu.memory_space<vmem>>) attributes {dimension_semantics = [#tpu.dimension_semantics<parallel>], iteration_bounds = array<i64: 2>, scalar_prefetch = 0 : i64, scratch_operands = 0 : i64, tpu.core_type = #tpu.core_type<tc>, window_params = [{transform_indices = @transform_0, window_bounds = array<i64: 1, 64, 32>}, {pipeline_mode = #tpu.pipeline_mode<synchronous>, transform_indices = @transform_1, window_bounds = array<i64: 1, 1, 32>}, {pipeline_mode = #tpu.pipeline_mode<synchronous>, transform_indices = @transform_2, window_bounds = array<i64: 1, 1, 32>}, {transform_indices = @transform_3, window_bounds = array<i64: 1, 64, 32>}]} {
    %c0 = arith.constant 0 : index
    %c0_0 = arith.constant 0 : index
    %c0_1 = arith.constant 0 : index
    %0 = vector.load %arg1[%c0, %c0_0, %c0_1] : memref<1x64x32xf32, #tpu.memory_space<vmem>>, vector<1x64x32xf32>
    %1 = arith.mulf %0, %0 : vector<1x64x32xf32>
    %cst = arith.constant dense<0.000000e+00> : vector<1x32xf32>
    %2 = vector.multi_reduction <add>, %1, %cst [1] : vector<1x64x32xf32> to vector<1x32xf32>
    %3 = vector.shape_cast %2 : vector<1x32xf32> to vector<1x1x32xf32>
    %4 = math.sqrt %3 : vector<1x1x32xf32>
    %cst_2 = arith.constant dense<0.000000e+00> : vector<1x1xf32>
    %5 = vector.multi_reduction <add>, %4, %cst_2 [2] : vector<1x1x32xf32> to vector<1x1xf32>
    %6 = vector.shape_cast %5 : vector<1x1xf32> to vector<1x1x1xf32>
    %cst_3 = arith.constant 3.125000e-02 : f32
    %7 = vector.broadcast %cst_3 : f32 to vector<1x1x1xf32>
    %8 = arith.mulf %6, %7 : vector<1x1x1xf32>
    %cst_4 = arith.constant 9.99999997E-7 : f32
    %9 = vector.broadcast %cst_4 : f32 to vector<1x1x1xf32>
    %10 = arith.addf %8, %9 : vector<1x1x1xf32>
    %11 = tpu.reciprocal %10 : vector<1x1x1xf32> -> vector<1x1x1xf32>
    %12 = vector.broadcast %11 : vector<1x1x1xf32> to vector<1x1x32xf32>
    %13 = arith.mulf %4, %12 : vector<1x1x32xf32>
    %c0_5 = arith.constant 0 : index
    %c0_6 = arith.constant 0 : index
    %c0_7 = arith.constant 0 : index
    %14 = vector.load %arg2[%c0_5, %c0_6, %c0_7] : memref<1x1x32xf32, #tpu.memory_space<vmem>>, vector<1x1x32xf32>
    %15 = arith.mulf %14, %13 : vector<1x1x32xf32>
    %cst_8 = arith.constant 1.000000e+00 : f32
    %16 = vector.broadcast %cst_8 : f32 to vector<1x1x32xf32>
    %17 = arith.addf %15, %16 : vector<1x1x32xf32>
    %c0_9 = arith.constant 0 : index
    %c0_10 = arith.constant 0 : index
    %c0_11 = arith.constant 0 : index
    %18 = vector.load %arg3[%c0_9, %c0_10, %c0_11] : memref<1x1x32xf32, #tpu.memory_space<vmem>>, vector<1x1x32xf32>
    %c0_12 = arith.constant 0 : index
    %c0_13 = arith.constant 0 : index
    %c0_14 = arith.constant 0 : index
    %19 = vector.load %arg1[%c0_12, %c0_13, %c0_14] : memref<1x64x32xf32, #tpu.memory_space<vmem>>, vector<1x64x32xf32>
    %20 = vector.broadcast %17 : vector<1x1x32xf32> to vector<1x64x32xf32>
    %21 = arith.mulf %19, %20 : vector<1x64x32xf32>
    %22 = vector.broadcast %18 : vector<1x1x32xf32> to vector<1x64x32xf32>
    %23 = arith.addf %21, %22 : vector<1x64x32xf32>
    %c0_15 = arith.constant 0 : index
    %c0_16 = arith.constant 0 : index
    %c0_17 = arith.constant 0 : index
    %24 = vector.load %arg4[%c0_15, %c0_16, %c0_17] : memref<1x64x32xf32, #tpu.memory_space<vmem>>, vector<1x64x32xf32>
    tpu.vector_store %arg4[%c0_15, %c0_16, %c0_17], %23 {strides = array<i32>} : memref<1x64x32xf32, #tpu.memory_space<vmem>>, vector<1x64x32xf32>,
    return
  }
  func.func @transform_0(%arg0: i32) -> (i32, i32, i32) {
    %c0_i32 = arith.constant 0 : i32
    %c0_i32_0 = arith.constant 0 : i32
    %c0_i32_1 = arith.constant 0 : i32
    return %arg0, %c0_i32, %c0_i32_0 : i32, i32, i32
  }
  func.func @transform_1(%arg0: i32) -> (i32, i32, i32) {
    %c0_i32 = arith.constant 0 : i32
    %c0_i32_0 = arith.constant 0 : i32
    %c0_i32_1 = arith.constant 0 : i32
    %c0_i32_2 = arith.constant 0 : i32
    return %c0_i32, %c0_i32_0, %c0_i32_1 : i32, i32, i32
  }
  func.func @transform_2(%arg0: i32) -> (i32, i32, i32) {
    %c0_i32 = arith.constant 0 : i32
    %c0_i32_0 = arith.constant 0 : i32
    %c0_i32_1 = arith.constant 0 : i32
    %c0_i32_2 = arith.constant 0 : i32
    return %c0_i32, %c0_i32_0, %c0_i32_1 : i32, i32, i32
  }
  func.func @transform_3(%arg0: i32) -> (i32, i32, i32) {
    %c0_i32 = arith.constant 0 : i32
    %c0_i32_0 = arith.constant 0 : i32
    %c0_i32_1 = arith.constant 0 : i32
    return %arg0, %c0_i32, %c0_i32_0 : i32, i32, i32
  }
}

</mosaic_0001>

<llo_original>
// kernel: tpu_custom_call.1
$region0: #{tpu_custom_call.1}
  #allocation0 [shape = 'u32[]', space=smem, size = 0x4, offset = 0x4, fixed_abs, tag = 'smem constant byte address 0x4 - core index']
  #allocation1 [shape = 'u32[72,128]{1,0:T(1,128)}', space=vmem, size = 0x9000, scoped, tag = 'internal scratch']
  %s0 = inlined_call_operand.vmem [shape: f32[2,64,32], index: 0, kind: input, shape index: {}]
  %s1 = inlined_call_operand.vmem [shape: f32[1,1,32], index: 1, kind: input, shape index: {}]
  %s2 = inlined_call_operand.vmem [shape: f32[1,1,32], index: 2, kind: input, shape index: {}]
  %s3 = inlined_call_operand.vmem [shape: f32[2,64,32], index: 3, kind: output, shape index: {}]
  %s4 = sld [smem:[#allocation0]]
  $region45: #{tpu_custom_call.1} parent=0
    _
  %s6 = ssub.s32 1, %s4
  %s7 = scalar_select 0, %s6, %s4
  loop: start=0, step=1, limit=4
  $region2: #{tpu_custom_call.1} parent=0 // loop_pre_header
    _
  $region3: #{tpu_custom_call.1} parent=0 // loop_header
    %s9 = sphi 0, %s13
    %p10 = scmp.ge.s32.totalorder %s9, 4
    %s19 = sphi 0, %s21
    %s22 = sphi 0, %s19
    %s23 = sphi 0, %s22
    %s39 = sphi 0, %s23
    %s43 = sphi 0, %s43
    %s45 = sphi 0, %s43
    %s46 = sphi 0, %s45
    %s60 = sphi 0, %s46
    %s64 = sphi 0, %s64
    %s66 = sphi 0, %s64
    %s67 = sphi 0, %s66
    %s81 = sphi 0, %s67
    %s87 = sphi 0, %s89
    %s90 = sphi 0, %s87
    %s91 = sphi 0, %s90
    %s107 = sphi 0, %s91
  $region4: #{tpu_custom_call.1} parent=0 // loop_header_branch
    %12 = sbr.rel (%p10) target = $region8
  $region5: #{tpu_custom_call.1} parent=0 // loop_body
    %s14 = ssub.s32 %s9, 1
    %s15 = ssub.s32 %s9, 2
    %s16 = sadd.s32 %s9, 1
    %s17 = ssub.s32 %s9, %s16
    %p18 = scmp.eq.s32.totalorder %s17, 0
    %s20 = sadd.s32 %s19, 1
    %s21 = scalar_select %p18, %s19, %s20
    %p24 = pneg %p18
    %p25 = scmp.eq.s32.totalorder %s9, 1
    %p26 = por %p24, %p25
    %p27 = scmp.ne.s32.totalorder %s19, %s22
    %p28 = scmp.eq.s32.totalorder %s9, 0
    %p29 = por %p27, %p28
    %p30 = scmp.ne.s32.totalorder %s19, %s22
    %p31 = scmp.eq.s32.totalorder %s14, 1
    %p32 = por %p30, %p31
    %p33 = scmp.ne.s32.totalorder %s22, %s23
    %p34 = scmp.eq.s32.totalorder %s14, 0
    %p35 = por %p33, %p34
    %p36 = scmp.ne.s32.totalorder %s22, %s23
    %p37 = scmp.eq.s32.totalorder %s15, 1
    %p38 = por %p36, %p37
    %p40 = scmp.ne.s32.totalorder %s23, %s39
    %p41 = scmp.eq.s32.totalorder %s15, 0
    %p42 = por %p40, %p41
    %s44 = sadd.s32 %s43, 1
    %p47 = scmp.eq.s32.totalorder %s9, 1
    %p48 = scmp.ne.s32.totalorder %s43, %s45
    %p49 = scmp.eq.s32.totalorder %s9, 0
    %p50 = por %p48, %p49
    %p51 = scmp.ne.s32.totalorder %s43, %s45
    %p52 = scmp.eq.s32.totalorder %s14, 1
    %p53 = por %p51, %p52
    %p54 = scmp.ne.s32.totalorder %s45, %s46
    %p55 = scmp.eq.s32.totalorder %s14, 0
    %p56 = por %p54, %p55
    %p57 = scmp.ne.s32.totalorder %s45, %s46
    %p58 = scmp.eq.s32.totalorder %s15, 1
    %p59 = por %p57, %p58
    %p61 = scmp.ne.s32.totalorder %s46, %s60
    %p62 = scmp.eq.s32.totalorder %s15, 0
    %p63 = por %p61, %p62
    %s65 = sadd.s32 %s64, 1
    %p68 = scmp.eq.s32.totalorder %s9, 1
    %p69 = scmp.ne.s32.totalorder %s64, %s66
    %p70 = scmp.eq.s32.totalorder %s9, 0
    %p71 = por %p69, %p70
    %p72 = scmp.ne.s32.totalorder %s64, %s66
    %p73 = scmp.eq.s32.totalorder %s14, 1
    %p74 = por %p72, %p73
    %p75 = scmp.ne.s32.totalorder %s66, %s67
    %p76 = scmp.eq.s32.totalorder %s14, 0
    %p77 = por %p75, %p76
    %p78 = scmp.ne.s32.totalorder %s66, %s67
    %p79 = scmp.eq.s32.totalorder %s15, 1
    %p80 = por %p78, %p79
    %p82 = scmp.ne.s32.totalorder %s67, %s81
    %p83 = scmp.eq.s32.totalorder %s15, 0
    %p84 = por %p82, %p83
    %s85 = ssub.s32 %s9, %s16
    %p86 = scmp.eq.s32.totalorder %s85, 0
    %s88 = sadd.s32 %s87, 1
    %s89 = scalar_select %p86, %s87, %s88
    %p92 = pneg %p86
    %p93 = scmp.eq.s32.totalorder %s9, 1
    %p94 = por %p92, %p93
    %p95 = scmp.ne.s32.totalorder %s87, %s90
    %p96 = scmp.eq.s32.totalorder %s9, 0
    %p97 = por %p95, %p96
    %p98 = scmp.ne.s32.totalorder %s87, %s90
    %p99 = scmp.eq.s32.totalorder %s14, 1
    %p100 = por %p98, %p99
    %p101 = scmp.ne.s32.totalorder %s90, %s91
    %p102 = scmp.eq.s32.totalorder %s14, 0
    %p103 = por %p101, %p102
    %p104 = scmp.ne.s32.totalorder %s90, %s91
    %p105 = scmp.eq.s32.totalorder %s15, 1
    %p106 = por %p104, %p105
    %p108 = scmp.ne.s32.totalorder %s91, %s107
    %p109 = scmp.eq.s32.totalorder %s15, 0
    %p110 = por %p108, %p109
    %p111 = scmp.le.s32.totalorder 1, %s9
    %p112 = scmp.lt.s32.totalorder %s9, 3
    %p113 = pnand %p111, %p112
    %p114 = pneg %p113
    // Predicated region
    $region9: #{tpu_custom_call.1} parent=5 // pred_check
      _
    $region10: #{tpu_custom_call.1} parent=5 // pred_check_branch
      %116 = sbr.rel (%p113) target = $region12
    $region11: #{tpu_custom_call.1} parent=5 // pred_region
      %s117 = ssub.s32 %s9, 1
      // Predicated region
      $region13: #{tpu_custom_call.1} parent=11 // pred_check
        %p118 = pneg %p56
      $region14: #{tpu_custom_call.1} parent=11 // pred_check_branch
        %120 = sbr.rel (%p118) target = $region16
      $region15: #{tpu_custom_call.1} parent=11 // pred_region
        _
      $region16: #{tpu_custom_call.1} parent=11 // pred_fallthru
        _
      // Predicated region
      $region17: #{tpu_custom_call.1} parent=11 // pred_check
        %p121 = pneg %p77
      $region18: #{tpu_custom_call.1} parent=11 // pred_check_branch
        %123 = sbr.rel (%p121) target = $region20
      $region19: #{tpu_custom_call.1} parent=11 // pred_region
        _
      $region20: #{tpu_custom_call.1} parent=11 // pred_fallthru
        _
    $region12: #{tpu_custom_call.1} parent=5 // pred_fallthru
      _
    %p124 = scmp.lt.s32.totalorder %s9, 2
    // Predicated region
    $region21: #{tpu_custom_call.1} parent=5 // pred_check
      %p125 = pneg %p124
    $region22: #{tpu_custom_call.1} parent=5 // pred_check_branch
      %127 = sbr.rel (%p125) target = $region24
    $region23: #{tpu_custom_call.1} parent=5 // pred_region
      // Predicated region
      $region25: #{tpu_custom_call.1} parent=23 // pred_check
        %p128 = pneg %p29
      $region26: #{tpu_custom_call.1} parent=23 // pred_check_branch
        %130 = sbr.rel (%p128) target = $region28
      $region27: #{tpu_custom_call.1} parent=23 // pred_region
        %p131 = scmp.lt.s32.totalorder %s9, 1
        %s132 = scalar_select %p131, %s9, 1
        %s133 = smul.addr %s132, 8
        %s134 = smul.addr %s133, 8
        %s135 = scalar_lea.vmem %s0, %s134
      $region28: #{tpu_custom_call.1} parent=23 // pred_fallthru
        _
    $region24: #{tpu_custom_call.1} parent=5 // pred_fallthru
      _
    %p136 = scmp.le.s32.totalorder 1, %s9
    %p137 = scmp.lt.s32.totalorder %s9, 3
    %p138 = pnand %p136, %p137
    %p139 = pneg %p138
    // Predicated region
    $region29: #{tpu_custom_call.1} parent=5 // pred_check
      _
    $region30: #{tpu_custom_call.1} parent=5 // pred_check_branch
      %141 = sbr.rel (%p138) target = $region32
    $region31: #{tpu_custom_call.1} parent=5 // pred_region
      %s142 = ssub.s32 %s9, 1
      %p143 = scmp.lt.s32.totalorder %s14, 1
      %s144 = scalar_select %p143, %s14, 1
      %s145 = smul.addr %s144, 8
      %s146 = smul.addr %s145, 8
      %s147 = scalar_lea.vmem %s0, %s146
      %p148 = pneg %p35
      %p149 = pneg %p32
      %p150 = pneg %p56
      %p151 = pneg %p53
      %p152 = pneg %p77
      %p153 = pneg %p74
      %p154 = pneg %p103
      %p155 = pneg %p100
      %p156 = scmp.lt.s32.totalorder %s14, 1
      %s157 = scalar_select %p156, %s14, 1
      %s158 = smul.addr %s157, 8
      %s159 = smul.addr %s158, 8
      %s160 = scalar_lea.vmem %s3, %s159
      %p161 = scmp.lt.s32.totalorder %s14, 1
      %s162 = scalar_select %p161, %s14, 1
      %s163 = smul.addr %s162, 8
      %s164 = smul.addr %s163, 8
      %s165 = scalar_lea.vmem %s0, %s164
      %p166 = scmp.lt.s32.totalorder %s14, 1
      %s167 = scalar_select %p166, %s14, 1
      %s168 = smul.addr %s167, 8
      %s169 = smul.addr %s168, 8
      %s170 = scalar_lea.vmem %s3, %s169
      %v171 = vld [vmem:[%s165] sm:$0xff]
      %v172 = vld [vmem:[%s165 + $0x8] sm:$0xff]
      %v173 = vld [vmem:[%s165 + $0x10] sm:$0xff]
      %v174 = vld [vmem:[%s165 + $0x18] sm:$0xff]
      %v175 = vld [vmem:[%s165 + $0x20] sm:$0xff]
      %v176 = vld [vmem:[%s165 + $0x28] sm:$0xff]
      %v177 = vld [vmem:[%s165 + $0x30] sm:$0xff]
      %v178 = vld [vmem:[%s165 + $0x38] sm:$0xff]
      %v179 = vmul.f32 %v171, %v171
      %v180 = vmul.f32 %v172, %v172
      %v181 = vmul.f32 %v173, %v173
      %v182 = vmul.f32 %v174, %v174
      %v183 = vmul.f32 %v175, %v175
      %v184 = vmul.f32 %v176, %v176
      %v185 = vmul.f32 %v177, %v177
      %v186 = vmul.f32 %v178, %v178
      %vm187 = vcmask 261120
      %v188 = vsel %vm187, %v179, 0.0
      %v189 = vsel %vm187, %v180, 0.0
      %v190 = vadd.f32 %v188, %v189
      %v191 = vsel %vm187, %v181, 0.0
      %v192 = vadd.f32 %v190, %v191
      %v193 = vsel %vm187, %v182, 0.0
      %v194 = vadd.f32 %v192, %v193
      %v195 = vsel %vm187, %v183, 0.0
      %v196 = vadd.f32 %v194, %v195
      %v197 = vsel %vm187, %v184, 0.0
      %v198 = vadd.f32 %v196, %v197
      %v199 = vsel %vm187, %v185, 0.0
      %v200 = vadd.f32 %v198, %v199
      %v201 = vsel %vm187, %v186, 0.0
      %v202 = vadd.f32 %v200, %v201
      %v203 = vrot.slane %v202, 4
      %v204 = vadd.f32 %v202, %v203
      %v205 = vrot.slane %v204, 2
      %v206 = vadd.f32 %v204, %v205
      %v207 = vrot.slane %v206, 1
      %v208 = vadd.f32 %v206, %v207
      %v209 = vrsqrt.pop %v208
      %v210 = vmul.f32 %v209, %v208
      %v211 = vmul.f32 %v210, %v209
      %v212 = vmul.f32 0.5, %v211
      %v213 = vsub.f32 1.5, %v212
      %v214 = vmul.f32 %v209, %v213
      %v215 = vmul.f32 %v208, %v214
      %vm216 = vcmp.eq.f32.partialorder %v208, inf
      %v217 = vsel %vm216, %v208, %v215
      %vm218 = vcmp.eq.f32.partialorder %v208, 0.0
      %v219 = vand.u32 %v208, 2147483648
      %v220 = vsel %vm218, %v219, %v217
      %v221 = vsel %vm187, %v220, 0.0
      %222 = vadd.xlane.f32.xlu0 %v221
      %v223 = vpop.xlane.xlu0 %222
      %v224 = vmul.f32 %v223, 0.03125
      %v225 = vadd.f32 %v224, 1e-06
      %v226 = vrcp.pop %v225
      %v227 = vmul.f32 %v225, %v226
      %v228 = vsub.f32 1.0, %v227
      %v229 = vmul.f32 %v226, %v228
      %v230 = vadd.f32 %v226, %v229
      %vm231 = vweird.f32 %v225
      %vm232 = vweird.f32 %v226
      %vm233 = vmor %vm231, %vm232
      %v234 = vsel %vm233, %v226, %v230
      %v235 = vand.u32 2147483647, %v225
      %vm236 = vcmp.eq.f32.partialorder %v235, 8.507059e+37
      %v237 = vand.u32 %v225, 2147483648
      %v238 = vor.u32 1.1754944e-38, %v237
      %v239 = vsel %vm236, %v238, %v234
      %v240 = vmul.f32 %v220, %v239
      %v241 = vld [vmem:[%s1] sm:$0x1]
      %v242 = vmul.f32 %v241, %v240
      %v243 = vadd.f32 %v242, 1.0
      %v244 = vld [vmem:[%s2] sm:$0x1]
      %v246 = vperm.slane %v243, 0
      %v248 = vmul.f32 %v171, %v246
      %v249 = vmul.f32 %v172, %v246
      %v250 = vmul.f32 %v173, %v246
      %v251 = vmul.f32 %v174, %v246
      %v252 = vmul.f32 %v175, %v246
      %v253 = vmul.f32 %v176, %v246
      %v254 = vmul.f32 %v177, %v246
      %v255 = vmul.f32 %v178, %v246
      %v257 = vperm.slane %v244, 0
      %v259 = vadd.f32 %v248, %v257
      %v260 = vadd.f32 %v249, %v257
      %v261 = vadd.f32 %v250, %v257
      %v262 = vadd.f32 %v251, %v257
      %v263 = vadd.f32 %v252, %v257
      %v264 = vadd.f32 %v253, %v257
      %v265 = vadd.f32 %v254, %v257
      %v266 = vadd.f32 %v255, %v257
      %267 = vst.msk [vmem:[%s170] sm:$0xff] %vm187, %v259
      %268 = vst.msk [vmem:[%s170 + $0x8] sm:$0xff] %vm187, %v260
      %269 = vst.msk [vmem:[%s170 + $0x10] sm:$0xff] %vm187, %v261
      %270 = vst.msk [vmem:[%s170 + $0x18] sm:$0xff] %vm187, %v262
      %271 = vst.msk [vmem:[%s170 + $0x20] sm:$0xff] %vm187, %v263
      %272 = vst.msk [vmem:[%s170 + $0x28] sm:$0xff] %vm187, %v264
      %273 = vst.msk [vmem:[%s170 + $0x30] sm:$0xff] %vm187, %v265
      %274 = vst.msk [vmem:[%s170 + $0x38] sm:$0xff] %vm187, %v266
      %p275 = scmp.lt.s32.totalorder %s14, 1
      %s276 = scalar_select %p275, %s14, 1
      %s277 = smul.addr %s276, 8
      %s278 = smul.addr %s277, 8
      %s279 = scalar_lea.vmem %s3, %s278
      // Predicated region
      $region33: #{tpu_custom_call.1} parent=31 // pred_check
        %p280 = pneg %p100
      $region34: #{tpu_custom_call.1} parent=31 // pred_check_branch
        %282 = sbr.rel (%p280) target = $region36
      $region35: #{tpu_custom_call.1} parent=31 // pred_region
        _
      $region36: #{tpu_custom_call.1} parent=31 // pred_fallthru
        _
    $region32: #{tpu_custom_call.1} parent=5 // pred_fallthru
      _
    %p283 = scmp.le.s32.totalorder 2, %s9
    // Predicated region
    $region37: #{tpu_custom_call.1} parent=5 // pred_check
      %p284 = pneg %p283
    $region38: #{tpu_custom_call.1} parent=5 // pred_check_branch
      %286 = sbr.rel (%p284) target = $region40
    $region39: #{tpu_custom_call.1} parent=5 // pred_region
      %s287 = ssub.s32 %s9, 2
      // Predicated region
      $region41: #{tpu_custom_call.1} parent=39 // pred_check
        %p288 = pneg %p106
      $region42: #{tpu_custom_call.1} parent=39 // pred_check_branch
        %290 = sbr.rel (%p288) target = $region44
      $region43: #{tpu_custom_call.1} parent=39 // pred_region
        %p291 = scmp.lt.s32.totalorder %s15, 1
        %s292 = scalar_select %p291, %s15, 1
        %s293 = smul.addr %s292, 8
        %s294 = smul.addr %s293, 8
        %s295 = scalar_lea.vmem %s3, %s294
      $region44: #{tpu_custom_call.1} parent=39 // pred_fallthru
        _
    $region40: #{tpu_custom_call.1} parent=5 // pred_fallthru
      _
  $region6: #{tpu_custom_call.1} parent=0 // loop_footer
    %s13 = sadd.s32 1, %s9
  $region7: #{tpu_custom_call.1} parent=0 // loop_footer_branch
    %8 = sbr.rel target = $region3
  $region8: #{tpu_custom_call.1} parent=0 // loop_exit
    _

</llo_original>
